<compile_context>
chip_gen: v5e
topology: v5e:2x2
jax: 0.10.0
libtpu: 0.0.40
codegen_flags: <defaults>
</compile_context>

<pallas_src>
import functools

import jax
import jax.numpy as jnp
from jax import lax
from jax.experimental import pallas as pl
from jax.experimental.pallas import tpu as pltpu

EPS = 1e-5


def _round_up(x, m):
    return ((x + m - 1) // m) * m


def _fold128(x, width):
    """Lane-aligned reduction (c, width) -> (c, 128). Pure vreg adds, no relayout."""
    r = x[:, 0:128]
    for j in range(1, width // 128):
        r = r + x[:, j * 128:(j + 1) * 128]
    return r


def _pdice_kernel(pred_ref, tgt_ref, i_ref, y_ref, z_ref, *, hw, tile, chunk):
    # pred_ref / tgt_ref: (1, C, tile) block; outputs: (1, 1, C, 128) block.
    c = pred_ref.shape[1]
    nchunks = tile // chunk
    base = pl.program_id(1) * tile                       # element offset of this tile in H*W
    lane = lax.broadcasted_iota(jnp.int32, (c, chunk), 1)

    acc_i = jnp.zeros((c, 128), jnp.float32)
    acc_y = jnp.zeros((c, 128), jnp.float32)
    acc_z = jnp.zeros((c, 128), jnp.float32)

    # Static (unrolled) chunk loop: lane-aligned constant offsets, short live ranges.
    for k in range(nchunks):
        sl = pl.ds(k * chunk, chunk)
        t = tgt_ref[0, :, sl].astype(jnp.float32)        # (C, chunk)
        x = pred_ref[0, :, sl].astype(jnp.float32)       # (C, chunk)

        # valid = not ignore-label AND within the real H*W extent (tail mask).
        valid = (t != -1.0) & ((lane + (base + k * chunk)) < hw)

        # sigmoid: exp runs on the EUP; divide is a handful of VALU ops (kernel
        # stays HBM-bound on all generations).  pl.reciprocal(approx=True) is an
        # option if VALU ever saturates on v7x.
        p = 1.0 / (1.0 + jnp.exp(-x))

        pv = jnp.where(valid, p, 0.0)                    # also zeroes any OOB garbage
        tv = jnp.where(valid, t, 0.0)

        acc_i = acc_i + _fold128(pv * tv, chunk)         # score * target   (masked)
        acc_y = acc_y + _fold128(tv * tv, chunk)         # target * target  (masked)
        acc_z = acc_z + _fold128(pv * pv, chunk)         # score * score    (masked)

    i_ref[0, 0] = acc_i
    y_ref[0, 0] = acc_y
    z_ref[0, 0] = acc_z


def pdice_loss(predict, target, num_classes=4, tile_hw=32768):
    """Masked Dice loss over NCHW inputs; per-block partial sums reduced in a Pallas kernel."""
    assert predict.shape == target.shape, "predict & target shape do not match"
    n, c, h, w = predict.shape
    assert c == num_classes
    hw = h * w

    # Free reshape (no transpose, no copy, no padding).
    p3 = predict.reshape(n, c, hw)
    t3 = target.reshape(n, c, hw)

    # Tile / chunk selection (all multiples of 128; chunk divides tile).
    chunk = 1024 if hw >= 1024 else _round_up(hw, 128)
    tile_hw = max(chunk, min(int(tile_hw), 131072))      # cap double-buffered VMEM use
    tile = min(_round_up(tile_hw, chunk), _round_up(hw, chunk))
    num_tiles = pl.cdiv(hw, tile)

    kernel = functools.partial(_pdice_kernel, hw=hw, tile=tile, chunk=chunk)

    part_shape = jax.ShapeDtypeStruct((n, num_tiles, c, 128), jnp.float32)
    part_spec = pl.BlockSpec((1, 1, c, 128), lambda b, t: (b, t, 0, 0))
    in_spec = pl.BlockSpec((1, c, tile), lambda b, t: (b, 0, t))

    # 2 inputs x 2 buffers x (sublane-padded 8) x tile x 4B, + outputs + headroom.
    vmem_needed = 2 * 2 * 8 * tile * 4 + 3 * 2 * 8 * 128 * 4 + (4 << 20)
    vmem_limit = min(max(vmem_needed, 8 << 20), 64 << 20)  # respect v7x 64 MiB physical VMEM

    i_part, y_part, z_part = pl.pallas_call(
        kernel,
        out_shape=(part_shape, part_shape, part_shape),
        grid_spec=pltpu.PrefetchScalarGridSpec(
            num_scalar_prefetch=0,
            grid=(n, num_tiles),
            in_specs=[in_spec, in_spec],
            out_specs=(part_spec, part_spec, part_spec),
        ),
        compiler_params=pltpu.CompilerParams(
            dimension_semantics=("parallel", "parallel"),
            vmem_limit_bytes=vmem_limit,
        ),
    )(p3, t3)

    # Tiny final combine (negligible vs. the in-kernel reduction).
    inter = jnp.sum(i_part, axis=(0, 1, 3))              # (C,)
    y_sum = jnp.sum(y_part, axis=(0, 1, 3))
    z_sum = jnp.sum(z_part, axis=(0, 1, 3))
    dc = (2.0 * inter + EPS) / (z_sum + y_sum + EPS)
    per_class = 1.0 - dc
    # torch: total_loss[total_loss == total_loss] (drop NaN), then / num_classes
    per_class = jnp.where(jnp.isnan(per_class), 0.0, per_class)
    return jnp.sum(per_class) / jnp.float32(num_classes)


def pdice_reference(predict, target, num_classes=4):
    """Pure-JAX reference mirroring the PyTorch module."""
    p = jax.nn.sigmoid(predict.astype(jnp.float32))
    t = target.astype(jnp.float32)
    losses = []
    for i in range(num_classes):
        mask = (t[:, i] != -1.0).astype(jnp.float32)
        inter = jnp.sum(p[:, i] * t[:, i] * mask)
        y_sum = jnp.sum(t[:, i] * t[:, i] * mask)
        z_sum = jnp.sum(p[:, i] * p[:, i] * mask)
        dc = (2.0 * inter + EPS) / (z_sum + y_sum + EPS)
        losses.append(1.0 - dc)
    losses = jnp.stack(losses)
    losses = jnp.where(jnp.isnan(losses), 0.0, losses)
    return jnp.sum(losses) / num_classes


if __name__ == "__main__":
    key = jax.random.PRNGKey(0)
    k_pred, k_lbl, k_ign = jax.random.split(key, 3)

    N, C, H, W = 2, 4, 16, 16
    predict = jax.random.normal(k_pred, (N, C, H, W), dtype=jnp.float32)
    # target in {0, 1}, with ~20% of entries set to -1 (ignore label)
    labels = jax.random.bernoulli(k_lbl, 0.5, (N, C, H, W)).astype(jnp.float32)
    ignore = jax.random.bernoulli(k_ign, 0.2, (N, C, H, W))
    target = jnp.where(ignore, -1.0, labels)

    loss = pdice_loss(predict, target, num_classes=C)
    jax.block_until_ready(loss)

    ref = pdice_reference(predict, target, num_classes=C)
    assert jnp.allclose(loss, ref, rtol=1e-4, atol=1e-4), (loss, ref)

    print("KERNEL_OK")
</pallas_src>

<mosaic_0001>
module attributes {stable_mosaic.version = 11 : i64} {
  func.func @_pdice_kernel(%arg0: i32, %arg1: i32, %arg2: memref<1x4x256xf32, #tpu.memory_space<vmem>>, %arg3: memref<1x4x256xf32, #tpu.memory_space<vmem>>, %arg4: memref<1x1x4x128xf32, #tpu.memory_space<vmem>>, %arg5: memref<1x1x4x128xf32, #tpu.memory_space<vmem>>, %arg6: memref<1x1x4x128xf32, #tpu.memory_space<vmem>>) attributes {dimension_semantics = [#tpu.dimension_semantics<parallel>, #tpu.dimension_semantics<parallel>], iteration_bounds = array<i64: 2, 1>, scalar_prefetch = 0 : i64, scratch_operands = 0 : i64, tpu.core_type = #tpu.core_type<tc>, window_params = [{transform_indices = @transform_0, window_bounds = array<i64: 1, 4, 256>}, {transform_indices = @transform_1, window_bounds = array<i64: 1, 4, 256>}, {transform_indices = @transform_2, window_bounds = array<i64: 1, 1, 4, 128>}, {transform_indices = @transform_3, window_bounds = array<i64: 1, 1, 4, 128>}, {transform_indices = @transform_4, window_bounds = array<i64: 1, 1, 4, 128>}]} {
    %c256_i32 = arith.constant 256 : i32
    %0 = arith.muli %arg1, %c256_i32 : i32
    %1 = tpu.iota {dimensions = array<i32: 1>} : vector<4x256xi32>
    %cst = arith.constant 0.000000e+00 : f32
    %2 = vector.broadcast %cst : f32 to vector<4x128xf32>
    %cst_0 = arith.constant 0.000000e+00 : f32
    %3 = vector.broadcast %cst_0 : f32 to vector<4x128xf32>
    %cst_1 = arith.constant 0.000000e+00 : f32
    %4 = vector.broadcast %cst_1 : f32 to vector<4x128xf32>
    %c0 = arith.constant 0 : index
    %c0_2 = arith.constant 0 : index
    %c0_3 = arith.constant 0 : index
    %5 = vector.load %arg3[%c0, %c0_2, %c0_3] : memref<1x4x256xf32, #tpu.memory_space<vmem>>, vector<1x4x256xf32>
    %6 = vector.shape_cast %5 : vector<1x4x256xf32> to vector<4x256xf32>
    %c0_4 = arith.constant 0 : index
    %c0_5 = arith.constant 0 : index
    %c0_6 = arith.constant 0 : index
    %7 = vector.load %arg2[%c0_4, %c0_5, %c0_6] : memref<1x4x256xf32, #tpu.memory_space<vmem>>, vector<1x4x256xf32>
    %8 = vector.shape_cast %7 : vector<1x4x256xf32> to vector<4x256xf32>
    %cst_7 = arith.constant -1.000000e+00 : f32
    %9 = vector.broadcast %cst_7 : f32 to vector<4x256xf32>
    %10 = arith.cmpf one, %6, %9 : vector<4x256xf32>
    %c0_i32 = arith.constant 0 : i32
    %11 = arith.addi %0, %c0_i32 : i32
    %12 = vector.broadcast %11 : i32 to vector<4x256xi32>
    %13 = arith.addi %1, %12 : vector<4x256xi32>
    %c256_i32_8 = arith.constant 256 : i32
    %14 = vector.broadcast %c256_i32_8 : i32 to vector<4x256xi32>
    %15 = arith.cmpi slt, %13, %14 : vector<4x256xi32>
    %16 = arith.andi %10, %15 : vector<4x256xi1>
    %cst_9 = arith.constant 0.000000e+00 : f32
    %17 = vector.broadcast %cst_9 : f32 to vector<4x256xf32>
    %18 = arith.subf %17, %8 : vector<4x256xf32>
    %19 = math.exp %18 : vector<4x256xf32>
    %cst_10 = arith.constant 1.000000e+00 : f32
    %20 = vector.broadcast %cst_10 : f32 to vector<4x256xf32>
    %21 = arith.addf %20, %19 : vector<4x256xf32>
    %cst_11 = arith.constant 1.000000e+00 : f32
    %22 = vector.broadcast %cst_11 : f32 to vector<4x256xf32>
    %23 = arith.divf %22, %21 : vector<4x256xf32>
    %cst_12 = arith.constant 0.000000e+00 : f32
    %24 = vector.broadcast %cst_12 : f32 to vector<4x256xf32>
    %25 = arith.select %16, %23, %24 : vector<4x256xi1>, vector<4x256xf32>
    %cst_13 = arith.constant 0.000000e+00 : f32
    %26 = vector.broadcast %cst_13 : f32 to vector<4x256xf32>
    %27 = arith.select %16, %6, %26 : vector<4x256xi1>, vector<4x256xf32>
    %28 = arith.mulf %25, %27 : vector<4x256xf32>
    %29 = vector.extract_strided_slice %28 {offsets = [0, 0], sizes = [4, 128], strides = [1, 1]} : vector<4x256xf32> to vector<4x128xf32>
    %30 = vector.extract_strided_slice %28 {offsets = [0, 128], sizes = [4, 128], strides = [1, 1]} : vector<4x256xf32> to vector<4x128xf32>
    %31 = arith.addf %29, %30 : vector<4x128xf32>
    %32 = arith.addf %2, %31 : vector<4x128xf32>
    %33 = arith.mulf %27, %27 : vector<4x256xf32>
    %34 = vector.extract_strided_slice %33 {offsets = [0, 0], sizes = [4, 128], strides = [1, 1]} : vector<4x256xf32> to vector<4x128xf32>
    %35 = vector.extract_strided_slice %33 {offsets = [0, 128], sizes = [4, 128], strides = [1, 1]} : vector<4x256xf32> to vector<4x128xf32>
    %36 = arith.addf %34, %35 : vector<4x128xf32>
    %37 = arith.addf %3, %36 : vector<4x128xf32>
    %38 = arith.mulf %25, %25 : vector<4x256xf32>
    %39 = vector.extract_strided_slice %38 {offsets = [0, 0], sizes = [4, 128], strides = [1, 1]} : vector<4x256xf32> to vector<4x128xf32>
    %40 = vector.extract_strided_slice %38 {offsets = [0, 128], sizes = [4, 128], strides = [1, 1]} : vector<4x256xf32> to vector<4x128xf32>
    %41 = arith.addf %39, %40 : vector<4x128xf32>
    %42 = arith.addf %4, %41 : vector<4x128xf32>
    %c0_14 = arith.constant 0 : index
    %c0_15 = arith.constant 0 : index
    %c0_16 = arith.constant 0 : index
    %c0_17 = arith.constant 0 : index
    %43 = vector.load %arg4[%c0_14, %c0_15, %c0_16, %c0_17] : memref<1x1x4x128xf32, #tpu.memory_space<vmem>>, vector<1x1x4x128xf32>
    %44 = vector.shape_cast %43 : vector<1x1x4x128xf32> to vector<4x128xf32>
    %45 = vector.shape_cast %32 : vector<4x128xf32> to vector<1x1x4x128xf32>
    tpu.vector_store %arg4[%c0_14, %c0_15, %c0_16, %c0_17], %45 {strides = array<i32>} : memref<1x1x4x128xf32, #tpu.memory_space<vmem>>, vector<1x1x4x128xf32>,
    %c0_18 = arith.constant 0 : index
    %c0_19 = arith.constant 0 : index
    %c0_20 = arith.constant 0 : index
    %c0_21 = arith.constant 0 : index
    %46 = vector.load %arg5[%c0_18, %c0_19, %c0_20, %c0_21] : memref<1x1x4x128xf32, #tpu.memory_space<vmem>>, vector<1x1x4x128xf32>
    %47 = vector.shape_cast %46 : vector<1x1x4x128xf32> to vector<4x128xf32>
    %48 = vector.shape_cast %37 : vector<4x128xf32> to vector<1x1x4x128xf32>
    tpu.vector_store %arg5[%c0_18, %c0_19, %c0_20, %c0_21], %48 {strides = array<i32>} : memref<1x1x4x128xf32, #tpu.memory_space<vmem>>, vector<1x1x4x128xf32>,
    %c0_22 = arith.constant 0 : index
    %c0_23 = arith.constant 0 : index
    %c0_24 = arith.constant 0 : index
    %c0_25 = arith.constant 0 : index
    %49 = vector.load %arg6[%c0_22, %c0_23, %c0_24, %c0_25] : memref<1x1x4x128xf32, #tpu.memory_space<vmem>>, vector<1x1x4x128xf32>
    %50 = vector.shape_cast %49 : vector<1x1x4x128xf32> to vector<4x128xf32>
    %51 = vector.shape_cast %42 : vector<4x128xf32> to vector<1x1x4x128xf32>
    tpu.vector_store %arg6[%c0_22, %c0_23, %c0_24, %c0_25], %51 {strides = array<i32>} : memref<1x1x4x128xf32, #tpu.memory_space<vmem>>, vector<1x1x4x128xf32>,
    return
  }
  func.func @transform_0(%arg0: i32, %arg1: i32) -> (i32, i32, i32) {
    %c0_i32 = arith.constant 0 : i32
    %c0_i32_0 = arith.constant 0 : i32
    return %arg0, %c0_i32, %arg1 : i32, i32, i32
  }
  func.func @transform_1(%arg0: i32, %arg1: i32) -> (i32, i32, i32) {
    %c0_i32 = arith.constant 0 : i32
    %c0_i32_0 = arith.constant 0 : i32
    return %arg0, %c0_i32, %arg1 : i32, i32, i32
  }
  func.func @transform_2(%arg0: i32, %arg1: i32) -> (i32, i32, i32, i32) {
    %c0_i32 = arith.constant 0 : i32
    %c0_i32_0 = arith.constant 0 : i32
    %c0_i32_1 = arith.constant 0 : i32
    return %arg0, %arg1, %c0_i32, %c0_i32_0 : i32, i32, i32, i32
  }
  func.func @transform_3(%arg0: i32, %arg1: i32) -> (i32, i32, i32, i32) {
    %c0_i32 = arith.constant 0 : i32
    %c0_i32_0 = arith.constant 0 : i32
    %c0_i32_1 = arith.constant 0 : i32
    return %arg0, %arg1, %c0_i32, %c0_i32_0 : i32, i32, i32, i32
  }
  func.func @transform_4(%arg0: i32, %arg1: i32) -> (i32, i32, i32, i32) {
    %c0_i32 = arith.constant 0 : i32
    %c0_i32_0 = arith.constant 0 : i32
    %c0_i32_1 = arith.constant 0 : i32
    return %arg0, %arg1, %c0_i32, %c0_i32_0 : i32, i32, i32, i32
  }
}

</mosaic_0001>

<llo_original>
// kernel: tpu_custom_call.1
$region0: #{tpu_custom_call.1}
  #allocation0 [shape = 'u32[]', space=smem, size = 0x4, offset = 0x4, fixed_abs, tag = 'smem constant byte address 0x4 - core index']
  #allocation1 [shape = 'u32[72,128]{1,0:T(1,128)}', space=vmem, size = 0x9000, scoped, tag = 'internal scratch']
  %s0 = inlined_call_operand.hbm [shape: f32[2,4,256], index: 0, kind: input, shape index: {}]
  %s1 = inlined_call_operand.hbm [shape: f32[2,4,256], index: 1, kind: input, shape index: {}]
  %s2 = inlined_call_operand.hbm [shape: f32[2,1,4,128], index: 2, kind: output, shape index: {0}]
  %s3 = inlined_call_operand.hbm [shape: f32[2,1,4,128], index: 3, kind: output, shape index: {1}]
  %s4 = inlined_call_operand.hbm [shape: f32[2,1,4,128], index: 4, kind: output, shape index: {2}]
  %5 = xla_tuple %s2, %s3, %s4
  %s6 = sld [smem:[#allocation0]]
  $region65: #{tpu_custom_call.1} parent=0
    _
  %s8 = ssub.s32 1, %s6
  %s9 = scalar_select 0, %s8, %s6
  $region1: #{tpu_custom_call.1} parent=0
    #allocation2 [shape = 'u8[8192]{0}', space=vmem, size = 0x2000, scoped, tag = 'input window, operand 0']
    #allocation3 [shape = 's32[2]{0}', space=sflag, size = 0x8, scoped, tag = 'scoped memory for tpu_custom_call.1']
    #allocation4 [shape = 's32[2]{0}', space=sflag, size = 0x8, scoped, tag = 'scoped memory for tpu_custom_call.1']
    #allocation5 [shape = 'u8[8192]{0}', space=vmem, size = 0x2000, scoped, tag = 'input window, operand 1']
    #allocation6 [shape = 's32[2]{0}', space=sflag, size = 0x8, scoped, tag = 'scoped memory for tpu_custom_call.1']
    #allocation7 [shape = 'u8[4096]{0}', space=vmem, size = 0x1000, scoped, tag = 'output window, operand 0']
    #allocation8 [shape = 'u8[4096]{0}', space=vmem, size = 0x1000, scoped, tag = 'output window, operand 1']
    #allocation9 [shape = 's32[2]{0}', space=sflag, size = 0x8, scoped, tag = 'scoped memory for tpu_custom_call.1']
    #allocation10 [shape = 'u8[4096]{0}', space=vmem, size = 0x1000, scoped, tag = 'output window, operand 2']
    %10 = vsyncpa [#allocation3], 0
    %s11 = scalar_lea.sflag [#allocation3], 1
    %12 = vsyncpa %s11, 0
    %13 = vsyncpa [#allocation6], 0
    %s14 = scalar_lea.sflag [#allocation6], 1
    %15 = vsyncpa %s14, 0
    %16 = vsyncpa [#allocation4], 0
    %s17 = scalar_lea.sflag [#allocation4], 1
    %18 = vsyncpa %s17, 0
    %19 = vsyncpa [#allocation9], 0
    %s20 = scalar_lea.sflag [#allocation9], 1
    %21 = vsyncpa %s20, 0
    loop: start=0, step=1, limit=4
    $region2: #{tpu_custom_call.1} parent=1 // loop_pre_header
      _
    $region3: #{tpu_custom_call.1} parent=1 // loop_header
      %s23 = sphi 0, %s27
      %p24 = scmp.ge.s32.totalorder %s23, 4
      %s30 = sphi 0, %s42
      %s31 = sphi 0, %s38
      %s32 = sphi 0, %s30
      %s33 = sphi 0, %s31
      %s34 = sphi 0, %s32
      %s35 = sphi 0, %s33
      %s47 = sphi 0, %s49
      %s50 = sphi 0, %s47
      %s51 = sphi 0, %s50
      %s67 = sphi 0, %s51
      %s75 = sphi 0, %s77
      %s78 = sphi 0, %s75
      %s79 = sphi 0, %s78
      %s95 = sphi 0, %s79
      %s103 = sphi 0, %s105
      %s106 = sphi 0, %s103
      %s107 = sphi 0, %s106
      %s123 = sphi 0, %s107
      %s131 = sphi 0, %s133
      %s134 = sphi 0, %s131
      %s135 = sphi 0, %s134
      %s151 = sphi 0, %s135
      %s159 = sphi 0, %s161
      %s162 = sphi 0, %s159
      %s163 = sphi 0, %s162
      %s179 = sphi 0, %s163
    $region4: #{tpu_custom_call.1} parent=1 // loop_header_branch
      %26 = sbr.rel (%p24) target = $region8
    $region5: #{tpu_custom_call.1} parent=1 // loop_body
      %s28 = ssub.s32 %s23, 1
      %s29 = ssub.s32 %s23, 2
      %s36 = sadd.s32 1, %s31
      %p37 = scmp.ge.s32.totalorder %s36, 1
      %s38 = scalar_select %p37, 0, %s36
      %s39 = sadd.s32 1, %s30
      %s40 = scalar_select %p37, %s39, %s30
      %p41 = scmp.ge.s32.totalorder %s40, 2
      %s42 = scalar_select %p41, 0, %s40
      %s43 = ssub.s32 %s30, %s42
      %s44 = ssub.s32 %s31, %s38
      %s45 = sor.u32 %s43, %s44
      %p46 = scmp.eq.s32.totalorder %s45, 0
      %s48 = sadd.s32 %s47, 1
      %s49 = scalar_select %p46, %s47, %s48
      %p52 = pneg %p46
      %p53 = scmp.eq.s32.totalorder %s23, 1
      %p54 = por %p52, %p53
      %p55 = scmp.ne.s32.totalorder %s47, %s50
      %p56 = scmp.eq.s32.totalorder %s23, 0
      %p57 = por %p55, %p56
      %p58 = scmp.ne.s32.totalorder %s47, %s50
      %p59 = scmp.eq.s32.totalorder %s28, 1
      %p60 = por %p58, %p59
      %p61 = scmp.ne.s32.totalorder %s50, %s51
      %p62 = scmp.eq.s32.totalorder %s28, 0
      %p63 = por %p61, %p62
      %p64 = scmp.ne.s32.totalorder %s50, %s51
      %p65 = scmp.eq.s32.totalorder %s29, 1
      %p66 = por %p64, %p65
      %p68 = scmp.ne.s32.totalorder %s51, %s67
      %p69 = scmp.eq.s32.totalorder %s29, 0
      %p70 = por %p68, %p69
      %s71 = ssub.s32 %s30, %s42
      %s72 = ssub.s32 %s31, %s38
      %s73 = sor.u32 %s71, %s72
      %p74 = scmp.eq.s32.totalorder %s73, 0
      %s76 = sadd.s32 %s75, 1
      %s77 = scalar_select %p74, %s75, %s76
      %p80 = pneg %p74
      %p81 = scmp.eq.s32.totalorder %s23, 1
      %p82 = por %p80, %p81
      %p83 = scmp.ne.s32.totalorder %s75, %s78
      %p84 = scmp.eq.s32.totalorder %s23, 0
      %p85 = por %p83, %p84
      %p86 = scmp.ne.s32.totalorder %s75, %s78
      %p87 = scmp.eq.s32.totalorder %s28, 1
      %p88 = por %p86, %p87
      %p89 = scmp.ne.s32.totalorder %s78, %s79
      %p90 = scmp.eq.s32.totalorder %s28, 0
      %p91 = por %p89, %p90
      %p92 = scmp.ne.s32.totalorder %s78, %s79
      %p93 = scmp.eq.s32.totalorder %s29, 1
      %p94 = por %p92, %p93
      %p96 = scmp.ne.s32.totalorder %s79, %s95
      %p97 = scmp.eq.s32.totalorder %s29, 0
      %p98 = por %p96, %p97
      %s99 = ssub.s32 %s30, %s42
      %s100 = ssub.s32 %s31, %s38
      %s101 = sor.u32 %s99, %s100
      %p102 = scmp.eq.s32.totalorder %s101, 0
      %s104 = sadd.s32 %s103, 1
      %s105 = scalar_select %p102, %s103, %s104
      %p108 = pneg %p102
      %p109 = scmp.eq.s32.totalorder %s23, 1
      %p110 = por %p108, %p109
      %p111 = scmp.ne.s32.totalorder %s103, %s106
      %p112 = scmp.eq.s32.totalorder %s23, 0
      %p113 = por %p111, %p112
      %p114 = scmp.ne.s32.totalorder %s103, %s106
      %p115 = scmp.eq.s32.totalorder %s28, 1
      %p116 = por %p114, %p115
      %p117 = scmp.ne.s32.totalorder %s106, %s107
      %p118 = scmp.eq.s32.totalorder %s28, 0
      %p119 = por %p117, %p118
      %p120 = scmp.ne.s32.totalorder %s106, %s107
      %p121 = scmp.eq.s32.totalorder %s29, 1
      %p122 = por %p120, %p121
      %p124 = scmp.ne.s32.totalorder %s107, %s123
      %p125 = scmp.eq.s32.totalorder %s29, 0
      %p126 = por %p124, %p125
      %s127 = ssub.s32 %s30, %s42
      %s128 = ssub.s32 %s31, %s38
      %s129 = sor.u32 %s127, %s128
      %p130 = scmp.eq.s32.totalorder %s129, 0
      %s132 = sadd.s32 %s131, 1
      %s133 = scalar_select %p130, %s131, %s132
      %p136 = pneg %p130
      %p137 = scmp.eq.s32.totalorder %s23, 1
      %p138 = por %p136, %p137
      %p139 = scmp.ne.s32.totalorder %s131, %s134
      %p140 = scmp.eq.s32.totalorder %s23, 0
      %p141 = por %p139, %p140
      %p142 = scmp.ne.s32.totalorder %s131, %s134
      %p143 = scmp.eq.s32.totalorder %s28, 1
      %p144 = por %p142, %p143
      %p145 = scmp.ne.s32.totalorder %s134, %s135
      %p146 = scmp.eq.s32.totalorder %s28, 0
      %p147 = por %p145, %p146
      %p148 = scmp.ne.s32.totalorder %s134, %s135
      %p149 = scmp.eq.s32.totalorder %s29, 1
      %p150 = por %p148, %p149
      %p152 = scmp.ne.s32.totalorder %s135, %s151
      %p153 = scmp.eq.s32.totalorder %s29, 0
      %p154 = por %p152, %p153
      %s155 = ssub.s32 %s30, %s42
      %s156 = ssub.s32 %s31, %s38
      %s157 = sor.u32 %s155, %s156
      %p158 = scmp.eq.s32.totalorder %s157, 0
      %s160 = sadd.s32 %s159, 1
      %s161 = scalar_select %p158, %s159, %s160
      %p164 = pneg %p158
      %p165 = scmp.eq.s32.totalorder %s23, 1
      %p166 = por %p164, %p165
      %p167 = scmp.ne.s32.totalorder %s159, %s162
      %p168 = scmp.eq.s32.totalorder %s23, 0
      %p169 = por %p167, %p168
      %p170 = scmp.ne.s32.totalorder %s159, %s162
      %p171 = scmp.eq.s32.totalorder %s28, 1
      %p172 = por %p170, %p171
      %p173 = scmp.ne.s32.totalorder %s162, %s163
      %p174 = scmp.eq.s32.totalorder %s28, 0
      %p175 = por %p173, %p174
      %p176 = scmp.ne.s32.totalorder %s162, %s163
      %p177 = scmp.eq.s32.totalorder %s29, 1
      %p178 = por %p176, %p177
      %p180 = scmp.ne.s32.totalorder %s163, %s179
      %p181 = scmp.eq.s32.totalorder %s29, 0
      %p182 = por %p180, %p181
      %p183 = scmp.le.s32.totalorder 1, %s23
      %p184 = scmp.lt.s32.totalorder %s23, 3
      %p185 = pnand %p183, %p184
      %p186 = pneg %p185
      // Predicated region
      $region9: #{tpu_custom_call.1} parent=5 // pred_check
        _
      $region10: #{tpu_custom_call.1} parent=5 // pred_check_branch
        %188 = sbr.rel (%p185) target = $region12
      $region11: #{tpu_custom_call.1} parent=5 // pred_region
        %s189 = ssub.s32 %s23, 1
      $region12: #{tpu_custom_call.1} parent=5 // pred_fallthru
        _
      %p190 = scmp.lt.s32.totalorder %s23, 2
      // Predicated region
      $region13: #{tpu_custom_call.1} parent=5 // pred_check
        %p191 = pneg %p190
      $region14: #{tpu_custom_call.1} parent=5 // pred_check_branch
        %193 = sbr.rel (%p191) target = $region16
      $region15: #{tpu_custom_call.1} parent=5 // pred_region
        // Predicated region
        $region17: #{tpu_custom_call.1} parent=15 // pred_check
          %p194 = pneg %p57
        $region18: #{tpu_custom_call.1} parent=15 // pred_check_branch
          %196 = sbr.rel (%p194) target = $region20
        $region19: #{tpu_custom_call.1} parent=15 // pred_region
          %s197 = sand.u32 %s47, 1
          %s198 = scalar_lea.sflag [#allocation3], %s197
          %s199 = sand.u32 %s47, 1
          %s200 = smul.addr %s199, 8
          %s201 = scalar_lea.vmem [#allocation2], %s200
          %s202 = smul.u32 2, %s31
          %204 = vsyncadd %s198, 0
          %s205 = smul.addr %s30, 2
          %s206 = sadd.s32 %s202, %s205
          %s207 = smul.addr %s206, 4
          %s208 = scalar_lea.hbm %s0, %s207
          %s210 = sshll.u32 %s208, 4
          %s211 = int_to_ptr.hbm [resolvable:$true] %s210
          %s212 = sshll.u32 %s201, 4
          %s213 = int_to_ptr.vmem [resolvable:$true] %s212
          %215 = dma.hbm_to_vmem [thread:$0]  %s211, 128, %s213, %s198
        $region20: #{tpu_custom_call.1} parent=15 // pred_fallthru
          _
        // Predicated region
        $region21: #{tpu_custom_call.1} parent=15 // pred_check
          %p216 = pneg %p85
        $region22: #{tpu_custom_call.1} parent=15 // pred_check_branch
          %218 = sbr.rel (%p216) target = $region24
        $region23: #{tpu_custom_call.1} parent=15 // pred_region
          %s219 = sand.u32 %s75, 1
          %s220 = scalar_lea.sflag [#allocation6], %s219
          %s221 = sand.u32 %s75, 1
          %s222 = smul.addr %s221, 8
          %s223 = scalar_lea.vmem [#allocation5], %s222
          %s224 = smul.u32 2, %s31
          %226 = vsyncadd %s220, 0
          %s227 = smul.addr %s30, 2
          %s228 = sadd.s32 %s224, %s227
          %s229 = smul.addr %s228, 4
          %s230 = scalar_lea.hbm %s1, %s229
          %s232 = sshll.u32 %s230, 4
          %s233 = int_to_ptr.hbm [resolvable:$true] %s232
          %s234 = sshll.u32 %s223, 4
          %s235 = int_to_ptr.vmem [resolvable:$true] %s234
          %237 = dma.hbm_to_vmem [thread:$0]  %s233, 128, %s235, %s220
        $region24: #{tpu_custom_call.1} parent=15 // pred_fallthru
          _
      $region16: #{tpu_custom_call.1} parent=5 // pred_fallthru
        _
      %p238 = scmp.le.s32.totalorder 1, %s23
      %p239 = scmp.lt.s32.totalorder %s23, 3
      %p240 = pnand %p238, %p239
      %p241 = pneg %p240
      // Predicated region
      $region25: #{tpu_custom_call.1} parent=5 // pred_check
        _
      $region26: #{tpu_custom_call.1} parent=5 // pred_check_branch
        %243 = sbr.rel (%p240) target = $region28
      $region27: #{tpu_custom_call.1} parent=5 // pred_region
        %s244 = ssub.s32 %s23, 1
        %s245 = sand.u32 %s50, 1
        %s246 = scalar_lea.sflag [#allocation3], %s245
        %s247 = sand.u32 %s50, 1
        %s248 = smul.addr %s247, 8
        %s249 = scalar_lea.vmem [#allocation2], %s248
        // Predicated region
        $region29: #{tpu_custom_call.1} parent=27 // pred_check
          %p250 = pneg %p63
        $region30: #{tpu_custom_call.1} parent=27 // pred_check_branch
          %252 = sbr.rel (%p250) target = $region32
        $region31: #{tpu_custom_call.1} parent=27 // pred_region
          %254 = dma.done %s246, 128
        $region32: #{tpu_custom_call.1} parent=27 // pred_fallthru
          _
        %s255 = sand.u32 %s78, 1
        %s256 = scalar_lea.sflag [#allocation6], %s255
        %s257 = sand.u32 %s78, 1
        %s258 = smul.addr %s257, 8
        %s259 = scalar_lea.vmem [#allocation5], %s258
        // Predicated region
        $region33: #{tpu_custom_call.1} parent=27 // pred_check
          %p260 = pneg %p91
        $region34: #{tpu_custom_call.1} parent=27 // pred_check_branch
          %262 = sbr.rel (%p260) target = $region36
        $region35: #{tpu_custom_call.1} parent=27 // pred_region
          %264 = dma.done %s256, 128
        $region36: #{tpu_custom_call.1} parent=27 // pred_fallthru
          _
        %s265 = sand.u32 %s50, 1
        %s266 = scalar_lea.sflag [#allocation3], %s265
        %s267 = sand.u32 %s50, 1
        %s268 = smul.addr %s267, 8
        %s269 = scalar_lea.vmem [#allocation2], %s268
        %p270 = pneg %p63
        %p271 = pneg %p60
        %s272 = sand.u32 %s78, 1
        %s273 = scalar_lea.sflag [#allocation6], %s272
        %s274 = sand.u32 %s78, 1
        %s275 = smul.addr %s274, 8
        %s276 = scalar_lea.vmem [#allocation5], %s275
        %p277 = pneg %p91
        %p278 = pneg %p88
        %p279 = pneg %p119
        %p280 = pneg %p116
        %s281 = sand.u32 %s106, 1
        %s282 = scalar_lea.sflag [#allocation4], %s281
        %s283 = sand.u32 %s106, 1
        %s284 = smul.addr %s283, 4
        %s285 = scalar_lea.vmem [#allocation7], %s284
        %p286 = pneg %p147
        %p287 = pneg %p144
        %s288 = sand.u32 %s28, 1
        %s289 = scalar_lea.sflag [#allocation9], %s288
        %s290 = sand.u32 %s134, 1
        %s291 = smul.addr %s290, 4
        %s292 = scalar_lea.vmem [#allocation8], %s291
        %p293 = pneg %p175
        %p294 = pneg %p172
        %s295 = sand.u32 %s28, 1
        %s296 = scalar_lea.sflag [#allocation9], %s295
        %s297 = sand.u32 %s162, 1
        %s298 = smul.addr %s297, 4
        %s299 = scalar_lea.vmem [#allocation10], %s298
        %s300 = smul.u32 2, %s33
        %s301 = smul.u32 2, %s33
        %s302 = smul.u32 %s33, 256
        %v303 = vlaneseq
        %v304 = vand.u32 %v303, 127
        %v305 = vadd.s32 %v304, 128
        %v306 = vld [vmem:[%s259] sm:$0xff]
        %v307 = vld [vmem:[%s249] sm:$0xff]
        %vm308 = vcmp.ne.f32.partialorder %v306, -1.0
        %v309 = vstv %s302
        %v310 = vadd.s32 %v304, %v309
        %v311 = vadd.s32 %v305, %v309
        %vm312 = vcmp.lt.s32.totalorder %v310, 256
        %vm313 = vcmp.lt.s32.totalorder %v311, 256
        %v314 = vsel %vm312, 1, 0
        %v315 = vsel %vm313, 1, 0
        %v316 = vrot.slane %v315, 4
        %vm317 = vcmask 1043456
        %v318 = vsel %vm317, %v314, %v316
        %vm319 = vcmp.ne.s32.totalorder %v318, 0
        %vm320 = vmand %vm308, %vm319
        %v321 = vsub.f32 0.0, %v307
        %v322 = vmul.f32 %v321, 1.442695
        %v323 = vpow.pop %v322
        %v324 = vadd.f32 %v323, 1.0
        %v325 = vrcp.pop %v324
        %v326 = vmul.f32 %v324, %v325
        %v327 = vsub.f32 1.0, %v326
        %v328 = vmul.f32 %v325, %v327
        %v329 = vadd.f32 %v325, %v328
        %vm330 = vweird.f32 %v324
        %vm331 = vweird.f32 %v325
        %vm332 = vmor %vm330, %vm331
        %v333 = vsel %vm332, %v325, %v329
        %v334 = vand.u32 2147483647, %v324
        %vm335 = vcmp.eq.f32.partialorder %v334, 8.507059e+37
        %v336 = vand.u32 %v324, 2147483648
        %v337 = vor.u32 1.1754944e-38, %v336
        %v338 = vsel %vm335, %v337, %v333
        %v339 = vmul.f32 1.0, %v338
        %v340 = vsel %vm320, %v339, 0.0
        %v341 = vsel %vm320, %v306, 0.0
        %v342 = vmul.f32 %v340, %v341
        %v344 = vrot.slane %v342, 4
        %v346 = vadd.f32 %v342, %v344
        %v347 = vadd.f32 %v346, 0.0
        %v348 = vmul.f32 %v341, %v341
        %v350 = vrot.slane %v348, 4
        %v352 = vadd.f32 %v348, %v350
        %v353 = vadd.f32 %v352, 0.0
        %v354 = vmul.f32 %v340, %v340
        %v356 = vrot.slane %v354, 4
        %v358 = vadd.f32 %v354, %v356
        %v359 = vadd.f32 %v358, 0.0
        %360 = vst [vmem:[%s285] sm:$0xf] %v347
        %361 = vst [vmem:[%s292] sm:$0xf] %v353
        %362 = vst [vmem:[%s299] sm:$0xf] %v359
        %s363 = sand.u32 %s106, 1
        %s364 = scalar_lea.sflag [#allocation4], %s363
        %s365 = sand.u32 %s106, 1
        %s366 = smul.addr %s365, 4
        %s367 = scalar_lea.vmem [#allocation7], %s366
        %s368 = sand.u32 %s28, 1
        %s369 = scalar_lea.sflag [#allocation9], %s368
        %s370 = sand.u32 %s134, 1
        %s371 = smul.addr %s370, 4
        %s372 = scalar_lea.vmem [#allocation8], %s371
        %s373 = sand.u32 %s28, 1
        %s374 = scalar_lea.sflag [#allocation9], %s373
        %s375 = sand.u32 %s162, 1
        %s376 = smul.addr %s375, 4
        %s377 = scalar_lea.vmem [#allocation10], %s376
        // Predicated region
        $region37: #{tpu_custom_call.1} parent=27 // pred_check
          %p378 = pneg %p116
        $region38: #{tpu_custom_call.1} parent=27 // pred_check_branch
          %380 = sbr.rel (%p378) target = $region40
        $region39: #{tpu_custom_call.1} parent=27 // pred_region
          %382 = vsyncadd %s364, 0
          %s383 = sadd.s32 %s33, %s32
          %s384 = smul.addr %s383, 4
          %s385 = scalar_lea.hbm %s2, %s384
          %s387 = sshll.u32 %s367, 4
          %s388 = int_to_ptr.vmem [resolvable:$true] %s387
          %s389 = sshll.u32 %s385, 4
          %s390 = int_to_ptr.hbm [resolvable:$true] %s389
          %392 = dma.vmem_to_hbm [thread:$0]  %s388, 64, %s390, %s364
        $region40: #{tpu_custom_call.1} parent=27 // pred_fallthru
          _
        // Predicated region
        $region41: #{tpu_custom_call.1} parent=27 // pred_check
          %p393 = pneg %p144
        $region42: #{tpu_custom_call.1} parent=27 // pred_check_branch
          %395 = sbr.rel (%p393) target = $region44
        $region43: #{tpu_custom_call.1} parent=27 // pred_region
          %397 = vsyncadd %s369, 0
          %s398 = sadd.s32 %s33, %s32
          %s399 = smul.addr %s398, 4
          %s400 = scalar_lea.hbm %s3, %s399
          %s402 = sshll.u32 %s372, 4
          %s403 = int_to_ptr.vmem [resolvable:$true] %s402
          %s404 = sshll.u32 %s400, 4
          %s405 = int_to_ptr.hbm [resolvable:$true] %s404
          %407 = dma.vmem_to_hbm [thread:$0]  %s403, 64, %s405, %s369
        $region44: #{tpu_custom_call.1} parent=27 // pred_fallthru
          _
        // Predicated region
        $region45: #{tpu_custom_call.1} parent=27 // pred_check
          %p408 = pneg %p172
        $region46: #{tpu_custom_call.1} parent=27 // pred_check_branch
          %410 = sbr.rel (%p408) target = $region48
        $region47: #{tpu_custom_call.1} parent=27 // pred_region
          %412 = vsyncadd %s374, 0
          %s413 = sadd.s32 %s33, %s32
          %s414 = smul.addr %s413, 4
          %s415 = scalar_lea.hbm %s4, %s414
          %s417 = sshll.u32 %s377, 4
          %s418 = int_to_ptr.vmem [resolvable:$true] %s417
          %s419 = sshll.u32 %s415, 4
          %s420 = int_to_ptr.hbm [resolvable:$true] %s419
          %422 = dma.vmem_to_hbm [thread:$0]  %s418, 64, %s420, %s374
        $region48: #{tpu_custom_call.1} parent=27 // pred_fallthru
          _
      $region28: #{tpu_custom_call.1} parent=5 // pred_fallthru
        _
      %p423 = scmp.le.s32.totalorder 2, %s23
      // Predicated region
      $region49: #{tpu_custom_call.1} parent=5 // pred_check
        %p424 = pneg %p423
      $region50: #{tpu_custom_call.1} parent=5 // pred_check_branch
        %426 = sbr.rel (%p424) target = $region52
      $region51: #{tpu_custom_call.1} parent=5 // pred_region
        %s427 = ssub.s32 %s23, 2
        // Predicated region
        $region53: #{tpu_custom_call.1} parent=51 // pred_check
          %p428 = pneg %p122
        $region54: #{tpu_custom_call.1} parent=51 // pred_check_branch
          %430 = sbr.rel (%p428) target = $region56
        $region55: #{tpu_custom_call.1} parent=51 // pred_region
          %s431 = sand.u32 %s107, 1
          %s432 = scalar_lea.sflag [#allocation4], %s431
          %s433 = sand.u32 %s107, 1
          %s434 = smul.addr %s433, 4
          %s435 = scalar_lea.vmem [#allocation7], %s434
          %437 = dma.done %s432, 64
        $region56: #{tpu_custom_call.1} parent=51 // pred_fallthru
          _
        // Predicated region
        $region57: #{tpu_custom_call.1} parent=51 // pred_check
          %p438 = pneg %p150
        $region58: #{tpu_custom_call.1} parent=51 // pred_check_branch
          %440 = sbr.rel (%p438) target = $region60
        $region59: #{tpu_custom_call.1} parent=51 // pred_region
          %s441 = sand.u32 %s29, 1
          %s442 = scalar_lea.sflag [#allocation9], %s441
          %s443 = sand.u32 %s135, 1
          %s444 = smul.addr %s443, 4
          %s445 = scalar_lea.vmem [#allocation8], %s444
          %447 = dma.done %s442, 64
        $region60: #{tpu_custom_call.1} parent=51 // pred_fallthru
          _
        // Predicated region
        $region61: #{tpu_custom_call.1} parent=51 // pred_check
          %p448 = pneg %p178
        $region62: #{tpu_custom_call.1} parent=51 // pred_check_branch
          %450 = sbr.rel (%p448) target = $region64
        $region63: #{tpu_custom_call.1} parent=51 // pred_region
          %s451 = sand.u32 %s29, 1
          %s452 = scalar_lea.sflag [#allocation9], %s451
          %s453 = sand.u32 %s163, 1
          %s454 = smul.addr %s453, 4
          %s455 = scalar_lea.vmem [#allocation10], %s454
          %457 = dma.done %s452, 64
        $region64: #{tpu_custom_call.1} parent=51 // pred_fallthru
          _
      $region52: #{tpu_custom_call.1} parent=5 // pred_fallthru
        _
    $region6: #{tpu_custom_call.1} parent=1 // loop_footer
      %s27 = sadd.s32 1, %s23
    $region7: #{tpu_custom_call.1} parent=1 // loop_footer_branch
      %22 = sbr.rel target = $region3
    $region8: #{tpu_custom_call.1} parent=1 // loop_exit
      _
    %458 = vsyncpa [#allocation3], 1
    %s459 = scalar_lea.sflag [#allocation3], 1
    %460 = vsyncpa %s459, 1
    %461 = vsyncpa [#allocation6], 1
    %s462 = scalar_lea.sflag [#allocation6], 1
    %463 = vsyncpa %s462, 1
    %464 = vsyncpa [#allocation4], 1
    %s465 = scalar_lea.sflag [#allocation4], 1
    %466 = vsyncpa %s465, 1
    %467 = vsyncpa [#allocation9], 1
    %s468 = scalar_lea.sflag [#allocation9], 1
    %469 = vsyncpa %s468, 1

</llo_original>
